<compile_context>
chip_gen: v7x
topology: tpu7x:2x2x1
jax: 0.10.0
libtpu: 0.0.40
codegen_flags: <defaults>
</compile_context>

<pallas_src>
import math

import jax
import jax.numpy as jnp
from jax.experimental import pallas as pl
from jax.experimental.pallas import tpu as pltpu


def _round_up(x, m):
    return ((x + m - 1) // m) * m


# ----------------------------------------------------------------------------
# Fused kernel: all shared layers + concatenated, lane-padded dual head.
# ----------------------------------------------------------------------------
def _make_fused_kernel(num_hidden, mm_dtype):
    """refs = (x, w0, [w_stack], shifts, w_heads, b_heads, out)."""

    def kernel(*refs):
        if num_hidden:
            x_ref, w0_ref, wstack_ref, shifts_ref, wh_ref, bh_ref, o_ref = refs
        else:
            x_ref, w0_ref, shifts_ref, wh_ref, bh_ref, o_ref = refs
            wstack_ref = None

        # Activation stays in vregs for the whole forward pass.
        h = x_ref[...].astype(jnp.float32)

        # Layer 0: (tile_B, F_in) @ (F_in, H); BN scale/shift pre-folded.
        y = jnp.dot(h.astype(mm_dtype), w0_ref[...],
                    preferred_element_type=jnp.float32)
        h = jnp.maximum(y + shifts_ref[0], 0.0)

        # Hidden layers: stacked (num_hidden, H, H); static slice is free.
        for l in range(num_hidden):
            y = jnp.dot(h.astype(mm_dtype), wstack_ref[l],
                        preferred_element_type=jnp.float32)
            h = jnp.maximum(y + shifts_ref[l + 1], 0.0)

        # Both heads as a single (H, N_PAD) matmul -> lane-dense (tile_B, N_PAD)
        # store; wrapper slices the 2*O real columns.
        out = jnp.dot(h.astype(mm_dtype), wh_ref[...],
                      preferred_element_type=jnp.float32) + bh_ref[...]
        o_ref[...] = out.astype(o_ref.dtype)

    return kernel


def dual_output_mlp_forward(folded, x, *, tile_b_max=256):
    """Runs the fused forward pass. Returns (out1, out2), each (B, O)."""
    w0 = folded["w0"]
    wstack = folded["wstack"]
    shifts = folded["shifts"]
    wh = folded["wh"]
    bh = folded["bh"]
    mm_dtype = folded["mm_dtype"]
    O = folded["output_size"]

    B, F_in = x.shape
    num_hidden = 0 if wstack is None else wstack.shape[0]
    n_pad = wh.shape[1]

    # Batch tiling: small batches -> single tile (rounded to a sublane multiple);
    # large batches -> tile_b_max-row tiles streamed through a "parallel" grid.
    if B <= tile_b_max:
        tile_b = max(8, _round_up(B, 8))
        b_pad = tile_b
    else:
        tile_b = tile_b_max
        b_pad = _round_up(B, tile_b)
    if b_pad != B:
        x = jnp.pad(x, ((0, b_pad - B), (0, 0)))
    grid = (pl.cdiv(b_pad, tile_b),)

    inputs = [x, w0]
    in_specs = [
        pl.BlockSpec((tile_b, F_in), lambda i: (i, 0)),
        pl.BlockSpec(w0.shape, lambda i: (0, 0)),
    ]
    if num_hidden:
        inputs.append(wstack)
        in_specs.append(pl.BlockSpec(wstack.shape, lambda i: (0, 0, 0)))
    inputs += [shifts, wh, bh]
    in_specs += [
        pl.BlockSpec(shifts.shape, lambda i: (0, 0, 0)),
        pl.BlockSpec(wh.shape, lambda i: (0, 0)),
        pl.BlockSpec(bh.shape, lambda i: (0, 0)),
    ]
    out_specs = pl.BlockSpec((tile_b, n_pad), lambda i: (i, 0))

    # Explicit VMEM budget (double-buffered tiles + resident weights), capped
    # below v7x's 64 MiB physical VMEM.
    tile_bytes = (
        tile_b * F_in * x.dtype.itemsize
        + tile_b * n_pad * 4
        + sum(int(a.size) * a.dtype.itemsize for a in inputs[1:])
    )
    vmem_limit = int(min(max(2 * tile_bytes + (8 << 20), 32 << 20), 64 << 20))

    out = pl.pallas_call(
        _make_fused_kernel(num_hidden, mm_dtype),
        out_shape=jax.ShapeDtypeStruct((b_pad, n_pad), jnp.float32),
        grid=grid,
        in_specs=in_specs,
        out_specs=out_specs,
        compiler_params=pltpu.CompilerParams(
            dimension_semantics=("parallel",),
            vmem_limit_bytes=vmem_limit,
        ),
    )(*inputs)

    out = out[:B]
    return out[:, :O], out[:, O:2 * O]


# ----------------------------------------------------------------------------
# Parameter construction (deterministic, PyTorch-style uniform init)
# ----------------------------------------------------------------------------
def _init_linear(key, fan_in, fan_out, dtype=jnp.float32):
    kw, kb = jax.random.split(key)
    bound = 1.0 / math.sqrt(fan_in)
    # stored as (in, out) == PyTorch weight.T
    w = jax.random.uniform(kw, (fan_in, fan_out), dtype, -bound, bound)
    b = jax.random.uniform(kb, (1, fan_out), dtype, -bound, bound)
    return w, b


def _init_batchnorm(key, num_features, eps=1e-5, dtype=jnp.float32):
    k1, k2 = jax.random.split(key)
    gamma = jnp.ones((1, num_features), dtype)
    beta = jnp.zeros((1, num_features), dtype)
    # deterministic "running" statistics
    running_mean = 0.1 * jax.random.normal(k1, (1, num_features), dtype)
    running_var = 1.0 + 0.1 * jax.random.uniform(k2, (1, num_features), dtype)
    scale = gamma / jnp.sqrt(running_var + eps)
    shift = beta - running_mean * scale
    return scale, shift


def build_params(key, input_size, hidden_size, output_size, num_layers):
    """Raw (unfolded) params: mirrors the PyTorch module's parameterization."""
    params = {"shared": []}
    in_f = input_size
    for _ in range(num_layers):
        key, k_lin, k_bn = jax.random.split(key, 3)
        w, b = _init_linear(k_lin, in_f, hidden_size)
        scale, shift = _init_batchnorm(k_bn, hidden_size)
        params["shared"].append((w, b, scale, shift))
        in_f = hidden_size
    key, k1, k2 = jax.random.split(key, 3)
    params["head1"] = _init_linear(k1, hidden_size, output_size)
    params["head2"] = _init_linear(k2, hidden_size, output_size)
    return params


def fold_params(params, output_size, mm_dtype=jnp.bfloat16):
    """Fold BN + bias into weights (in f32), stack layers, pad heads to 128 lanes.

    Per layer:  y = relu(((x @ W) + b) * scale + shift)
              = relu(x @ (W * scale) + (b * scale + shift))
    The fold is done in f32; only the MXU operands are cast to mm_dtype
    afterwards (bf16 on v6e/v7x; pass jnp.float32 for exact verification).
    """
    ws, ss = [], []
    for (w, b, scale, shift) in params["shared"]:
        w_f = w.astype(jnp.float32) * scale.astype(jnp.float32)
        s_f = (b.astype(jnp.float32) * scale.astype(jnp.float32)
               + shift.astype(jnp.float32))
        ws.append(w_f)
        ss.append(s_f)

    w0 = ws[0].astype(mm_dtype)                              # (F_in, H)
    wstack = (jnp.stack([w.astype(mm_dtype) for w in ws[1:]], axis=0)
              if len(ws) > 1 else None)                      # (L-1, H, H)
    shifts = jnp.stack(ss, axis=0)                           # (L, 1, H) f32

    w1, b1 = params["head1"]
    w2, b2 = params["head2"]
    wh = jnp.concatenate([w1, w2], axis=1).astype(jnp.float32)   # (H, 2*O)
    bh = jnp.concatenate([b1, b2], axis=1).astype(jnp.float32)   # (1, 2*O)
    n_pad = _round_up(max(wh.shape[1], 128), 128)                # lane-dense store
    wh = jnp.pad(wh, ((0, 0), (0, n_pad - wh.shape[1]))).astype(mm_dtype)
    bh = jnp.pad(bh, ((0, 0), (0, n_pad - bh.shape[1])))         # f32

    return {"w0": w0, "wstack": wstack, "shifts": shifts, "wh": wh, "bh": bh,
            "mm_dtype": mm_dtype, "output_size": output_size}


# ----------------------------------------------------------------------------
# Pure-JAX reference (unfolded params, original op order)
# ----------------------------------------------------------------------------
def _reference_forward(params, x):
    feats = x
    for (w, b, scale, shift) in params["shared"]:
        feats = jnp.maximum((feats @ w + b) * scale + shift, 0.0)
    w1, b1 = params["head1"]
    w2, b2 = params["head2"]
    return feats @ w1 + b1, feats @ w2 + b2


if __name__ == "__main__":
    input_size, hidden_size, output_size, num_layers = 16, 32, 2, 3
    batch = 8

    key = jax.random.PRNGKey(0)
    key, kx, kp = jax.random.split(key, 3)
    x = jax.random.normal(kx, (batch, input_size), jnp.float32)
    params = build_params(kp, input_size, hidden_size, output_size, num_layers)
    ref1, ref2 = _reference_forward(params, x)

    # 1) f32 matmul path: must match the reference tightly.
    folded_f32 = fold_params(params, output_size, mm_dtype=jnp.float32)
    out1, out2 = dual_output_mlp_forward(folded_f32, x)
    jax.block_until_ready((out1, out2))
    assert out1.shape == (batch, output_size) and out2.shape == (batch, output_size)
    assert jnp.allclose(out1, ref1, atol=1e-5, rtol=1e-5)
    assert jnp.allclose(out2, ref2, atol=1e-5, rtol=1e-5)

    # 2) bf16 matmul-operand path (v6e/v7x MXU-native): looser tolerance.
    folded_bf16 = fold_params(params, output_size, mm_dtype=jnp.bfloat16)
    b1o, b2o = dual_output_mlp_forward(folded_bf16, x)
    jax.block_until_ready((b1o, b2o))
    assert jnp.allclose(b1o, ref1, atol=5e-2, rtol=5e-2)
    assert jnp.allclose(b2o, ref2, atol=5e-2, rtol=5e-2)

    print("KERNEL_OK")
</pallas_src>

<mosaic_0001>
module attributes {stable_mosaic.version = 11 : i64} {
  func.func @kernel(%arg0: i32, %arg1: memref<8x16xf32, #tpu.memory_space<vmem>>, %arg2: memref<16x32xf32, #tpu.memory_space<vmem>>, %arg3: memref<2x32x32xf32, #tpu.memory_space<vmem>>, %arg4: memref<3x1x32xf32, #tpu.memory_space<vmem>>, %arg5: memref<32x128xf32, #tpu.memory_space<vmem>>, %arg6: memref<1x128xf32, #tpu.memory_space<vmem>>, %arg7: memref<8x128xf32, #tpu.memory_space<vmem>>) attributes {dimension_semantics = [#tpu.dimension_semantics<parallel>], iteration_bounds = array<i64: 1>, scalar_prefetch = 0 : i64, scratch_operands = 0 : i64, tpu.core_type = #tpu.core_type<tc>, window_params = [{transform_indices = @transform_0, window_bounds = array<i64: 8, 16>}, {pipeline_mode = #tpu.pipeline_mode<synchronous>, transform_indices = @transform_1, window_bounds = array<i64: 16, 32>}, {pipeline_mode = #tpu.pipeline_mode<synchronous>, transform_indices = @transform_2, window_bounds = array<i64: 2, 32, 32>}, {pipeline_mode = #tpu.pipeline_mode<synchronous>, transform_indices = @transform_3, window_bounds = array<i64: 3, 1, 32>}, {pipeline_mode = #tpu.pipeline_mode<synchronous>, transform_indices = @transform_4, window_bounds = array<i64: 32, 128>}, {pipeline_mode = #tpu.pipeline_mode<synchronous>, transform_indices = @transform_5, window_bounds = array<i64: 1, 128>}, {transform_indices = @transform_6, window_bounds = array<i64: 8, 128>}]} {
    %c0 = arith.constant 0 : index
    %c0_0 = arith.constant 0 : index
    %0 = vector.load %arg1[%c0, %c0_0] : memref<8x16xf32, #tpu.memory_space<vmem>>, vector<8x16xf32>
    %c0_1 = arith.constant 0 : index
    %c0_2 = arith.constant 0 : index
    %1 = vector.load %arg2[%c0_1, %c0_2] : memref<16x32xf32, #tpu.memory_space<vmem>>, vector<16x32xf32>
    %cst = arith.constant dense<0.000000e+00> : vector<8x32xf32>
    %2 = tpu.matmul %0, %1, %cst {dimension_numbers = #tpu.dot_dimension_numbers<[1], [0], [0], [1], [0, 0, 1, 1], [], []>} : vector<8x16xf32>, vector<16x32xf32>, vector<8x32xf32> -> vector<8x32xf32>
    %c0_3 = arith.constant 0 : index
    %c0_4 = arith.constant 0 : index
    %c0_5 = arith.constant 0 : index
    %3 = vector.load %arg4[%c0_3, %c0_4, %c0_5] : memref<3x1x32xf32, #tpu.memory_space<vmem>>, vector<1x1x32xf32>
    %4 = vector.shape_cast %3 : vector<1x1x32xf32> to vector<1x32xf32>
    %5 = vector.broadcast %4 : vector<1x32xf32> to vector<8x32xf32>
    %6 = arith.addf %2, %5 : vector<8x32xf32>
    %cst_6 = arith.constant 0.000000e+00 : f32
    %7 = vector.broadcast %cst_6 : f32 to vector<8x32xf32>
    %8 = arith.maximumf %6, %7 : vector<8x32xf32>
    %c0_7 = arith.constant 0 : index
    %c0_8 = arith.constant 0 : index
    %c0_9 = arith.constant 0 : index
    %9 = vector.load %arg3[%c0_7, %c0_8, %c0_9] : memref<2x32x32xf32, #tpu.memory_space<vmem>>, vector<1x32x32xf32>
    %10 = vector.shape_cast %9 : vector<1x32x32xf32> to vector<32x32xf32>
    %cst_10 = arith.constant dense<0.000000e+00> : vector<8x32xf32>
    %11 = tpu.matmul %8, %10, %cst_10 {dimension_numbers = #tpu.dot_dimension_numbers<[1], [0], [0], [1], [0, 0, 1, 1], [], []>} : vector<8x32xf32>, vector<32x32xf32>, vector<8x32xf32> -> vector<8x32xf32>
    %c1 = arith.constant 1 : index
    %c0_11 = arith.constant 0 : index
    %c0_12 = arith.constant 0 : index
    %12 = vector.load %arg4[%c1, %c0_11, %c0_12] : memref<3x1x32xf32, #tpu.memory_space<vmem>>, vector<1x1x32xf32>
    %13 = vector.shape_cast %12 : vector<1x1x32xf32> to vector<1x32xf32>
    %14 = vector.broadcast %13 : vector<1x32xf32> to vector<8x32xf32>
    %15 = arith.addf %11, %14 : vector<8x32xf32>
    %cst_13 = arith.constant 0.000000e+00 : f32
    %16 = vector.broadcast %cst_13 : f32 to vector<8x32xf32>
    %17 = arith.maximumf %15, %16 : vector<8x32xf32>
    %c1_14 = arith.constant 1 : index
    %c0_15 = arith.constant 0 : index
    %c0_16 = arith.constant 0 : index
    %18 = vector.load %arg3[%c1_14, %c0_15, %c0_16] : memref<2x32x32xf32, #tpu.memory_space<vmem>>, vector<1x32x32xf32>
    %19 = vector.shape_cast %18 : vector<1x32x32xf32> to vector<32x32xf32>
    %cst_17 = arith.constant dense<0.000000e+00> : vector<8x32xf32>
    %20 = tpu.matmul %17, %19, %cst_17 {dimension_numbers = #tpu.dot_dimension_numbers<[1], [0], [0], [1], [0, 0, 1, 1], [], []>} : vector<8x32xf32>, vector<32x32xf32>, vector<8x32xf32> -> vector<8x32xf32>
    %c2 = arith.constant 2 : index
    %c0_18 = arith.constant 0 : index
    %c0_19 = arith.constant 0 : index
    %21 = vector.load %arg4[%c2, %c0_18, %c0_19] : memref<3x1x32xf32, #tpu.memory_space<vmem>>, vector<1x1x32xf32>
    %22 = vector.shape_cast %21 : vector<1x1x32xf32> to vector<1x32xf32>
    %23 = vector.broadcast %22 : vector<1x32xf32> to vector<8x32xf32>
    %24 = arith.addf %20, %23 : vector<8x32xf32>
    %cst_20 = arith.constant 0.000000e+00 : f32
    %25 = vector.broadcast %cst_20 : f32 to vector<8x32xf32>
    %26 = arith.maximumf %24, %25 : vector<8x32xf32>
    %c0_21 = arith.constant 0 : index
    %c0_22 = arith.constant 0 : index
    %27 = vector.load %arg5[%c0_21, %c0_22] : memref<32x128xf32, #tpu.memory_space<vmem>>, vector<32x128xf32>
    %cst_23 = arith.constant dense<0.000000e+00> : vector<8x128xf32>
    %28 = tpu.matmul %26, %27, %cst_23 {dimension_numbers = #tpu.dot_dimension_numbers<[1], [0], [0], [1], [0, 0, 1, 1], [], []>} : vector<8x32xf32>, vector<32x128xf32>, vector<8x128xf32> -> vector<8x128xf32>
    %c0_24 = arith.constant 0 : index
    %c0_25 = arith.constant 0 : index
    %29 = vector.load %arg6[%c0_24, %c0_25] : memref<1x128xf32, #tpu.memory_space<vmem>>, vector<1x128xf32>
    %30 = vector.broadcast %29 : vector<1x128xf32> to vector<8x128xf32>
    %31 = arith.addf %28, %30 : vector<8x128xf32>
    %c0_26 = arith.constant 0 : index
    %c0_27 = arith.constant 0 : index
    %32 = vector.load %arg7[%c0_26, %c0_27] : memref<8x128xf32, #tpu.memory_space<vmem>>, vector<8x128xf32>
    tpu.vector_store %arg7[%c0_26, %c0_27], %31 {strides = array<i32>} : memref<8x128xf32, #tpu.memory_space<vmem>>, vector<8x128xf32>,
    return
  }
  func.func @transform_0(%arg0: i32) -> (i32, i32) {
    %c0_i32 = arith.constant 0 : i32
    %c0_i32_0 = arith.constant 0 : i32
    return %arg0, %c0_i32 : i32, i32
  }
  func.func @transform_1(%arg0: i32) -> (i32, i32) {
    %c0_i32 = arith.constant 0 : i32
    %c0_i32_0 = arith.constant 0 : i32
    %c0_i32_1 = arith.constant 0 : i32
    return %c0_i32, %c0_i32_0 : i32, i32
  }
  func.func @transform_2(%arg0: i32) -> (i32, i32, i32) {
    %c0_i32 = arith.constant 0 : i32
    %c0_i32_0 = arith.constant 0 : i32
    %c0_i32_1 = arith.constant 0 : i32
    %c0_i32_2 = arith.constant 0 : i32
    return %c0_i32, %c0_i32_0, %c0_i32_1 : i32, i32, i32
  }
  func.func @transform_3(%arg0: i32) -> (i32, i32, i32) {
    %c0_i32 = arith.constant 0 : i32
    %c0_i32_0 = arith.constant 0 : i32
    %c0_i32_1 = arith.constant 0 : i32
    %c0_i32_2 = arith.constant 0 : i32
    return %c0_i32, %c0_i32_0, %c0_i32_1 : i32, i32, i32
  }
  func.func @transform_4(%arg0: i32) -> (i32, i32) {
    %c0_i32 = arith.constant 0 : i32
    %c0_i32_0 = arith.constant 0 : i32
    %c0_i32_1 = arith.constant 0 : i32
    return %c0_i32, %c0_i32_0 : i32, i32
  }
  func.func @transform_5(%arg0: i32) -> (i32, i32) {
    %c0_i32 = arith.constant 0 : i32
    %c0_i32_0 = arith.constant 0 : i32
    %c0_i32_1 = arith.constant 0 : i32
    return %c0_i32, %c0_i32_0 : i32, i32
  }
  func.func @transform_6(%arg0: i32) -> (i32, i32) {
    %c0_i32 = arith.constant 0 : i32
    %c0_i32_0 = arith.constant 0 : i32
    return %arg0, %c0_i32 : i32, i32
  }
}

</mosaic_0001>

<llo_original>
// kernel: tpu_custom_call.1
$region0: #{tpu_custom_call.1}
  #allocation0 [shape = 'u32[]', space=smem, size = 0x4, offset = 0x4, fixed_abs, tag = 'smem constant byte address 0x4 - core index']
  #allocation1 [shape = 'u32[144,128]{1,0:T(1,128)}', space=vmem, size = 0x12000, scoped, tag = 'internal scratch']
  %s0 = inlined_call_operand.hbm [shape: f32[8,16], index: 0, kind: input, shape index: {}]
  %s1 = inlined_call_operand.hbm [shape: f32[16,32], index: 1, kind: input, shape index: {}]
  %s2 = inlined_call_operand.hbm [shape: f32[2,32,32], index: 2, kind: input, shape index: {}]
  %s3 = inlined_call_operand.vmem [shape: f32[3,1,32], index: 3, kind: input, shape index: {}]
  %s4 = inlined_call_operand.hbm [shape: f32[32,128], index: 4, kind: input, shape index: {}]
  %s5 = inlined_call_operand.vmem [shape: f32[1,128], index: 5, kind: input, shape index: {}]
  %s6 = inlined_call_operand.hbm [shape: f32[8,128], index: 6, kind: output, shape index: {}]
  %s7 = sld [smem:[#allocation0]]
  $region50: #{tpu_custom_call.1} parent=0
    _
  %s9 = ssub.s32 1, %s7
  %s10 = scalar_select 0, %s9, %s7
  $region1: #{tpu_custom_call.1} parent=0
    #allocation2 [shape = 'u8[4096]{0}', space=vmem, size = 0x1000, scoped, tag = 'input window, operand 0, single buffered']
    #allocation3 [shape = 's32[1]{0}', space=sflag, size = 0x4, scoped, tag = 'scoped memory for tpu_custom_call.1']
    #allocation4 [shape = 's32[1]{0}', space=sflag, size = 0x4, scoped, tag = 'scoped memory for tpu_custom_call.1']
    #allocation5 [shape = 'u8[8192]{0}', space=vmem, size = 0x2000, scoped, tag = 'input window, operand 1, single buffered']
    #allocation6 [shape = 's32[1]{0}', space=sflag, size = 0x4, scoped, tag = 'scoped memory for tpu_custom_call.1']
    #allocation7 [shape = 'u8[32768]{0}', space=vmem, size = 0x8000, scoped, tag = 'input window, operand 2, single buffered']
    #allocation8 [shape = 'u8[16384]{0}', space=vmem, size = 0x4000, scoped, tag = 'input window, operand 4, single buffered']
    #allocation9 [shape = 's32[1]{0}', space=sflag, size = 0x4, scoped, tag = 'scoped memory for tpu_custom_call.1']
    #allocation10 [shape = 'u8[4096]{0}', space=vmem, size = 0x1000, scoped, tag = 'output window, operand 0, single buffered']
    %11 = vsyncpa [#allocation3], 0
    %12 = vsyncpa [#allocation6], 0
    %13 = vsyncpa [#allocation9], 0
    %14 = vsyncpa [#allocation4], 0
    // Predicated region
    $region2: #{tpu_custom_call.1} parent=1 // pred_check
      _
    $region3: #{tpu_custom_call.1} parent=1 // pred_check_branch
      %16 = sbr.rel (0) target = $region5
    $region4: #{tpu_custom_call.1} parent=1 // pred_region
      %s18 = ssub.s32 128, 128
      %19 = vsyncadd [#allocation3], %s18
      %s21 = sshll.u32 [#allocation2], 4
      %s22 = int_to_ptr.vmem [resolvable:$true] %s21
      %24 = dma.hbm_to_vmem [thread:$0]  %s0, 128, %s22, [#allocation3]
    $region5: #{tpu_custom_call.1} parent=1 // pred_fallthru
      _
    // Predicated region
    $region6: #{tpu_custom_call.1} parent=1 // pred_check
      _
    $region7: #{tpu_custom_call.1} parent=1 // pred_check_branch
      %26 = sbr.rel (0) target = $region9
    $region8: #{tpu_custom_call.1} parent=1 // pred_region
      %s28 = ssub.s32 256, 256
      %29 = vsyncadd [#allocation6], %s28
      %s30 = sshll.u32 [#allocation5], 4
      %s31 = int_to_ptr.vmem [resolvable:$true] %s30
      %36 = dma.hbm_to_vmem [thread:$0]  %s1, 256, %s31, [#allocation6], 128, 128, 8
    $region9: #{tpu_custom_call.1} parent=1 // pred_fallthru
      _
    // Predicated region
    $region10: #{tpu_custom_call.1} parent=1 // pred_check
      _
    $region11: #{tpu_custom_call.1} parent=1 // pred_check_branch
      %38 = sbr.rel (0) target = $region13
    $region12: #{tpu_custom_call.1} parent=1 // pred_region
      %s40 = ssub.s32 1024, 1024
      %41 = vsyncadd [#allocation6], %s40
      %s42 = sshll.u32 [#allocation7], 4
      %s43 = int_to_ptr.vmem [resolvable:$true] %s42
      %48 = dma.hbm_to_vmem [thread:$0]  %s2, 1024, %s43, [#allocation6], 128, 128, 8
    $region13: #{tpu_custom_call.1} parent=1 // pred_fallthru
      _
    // Predicated region
    $region14: #{tpu_custom_call.1} parent=1 // pred_check
      _
    $region15: #{tpu_custom_call.1} parent=1 // pred_check_branch
      %50 = sbr.rel (0) target = $region17
    $region16: #{tpu_custom_call.1} parent=1 // pred_region
      _
    $region17: #{tpu_custom_call.1} parent=1 // pred_fallthru
      _
    // Predicated region
    $region18: #{tpu_custom_call.1} parent=1 // pred_check
      _
    $region19: #{tpu_custom_call.1} parent=1 // pred_check_branch
      %52 = sbr.rel (0) target = $region21
    $region20: #{tpu_custom_call.1} parent=1 // pred_region
      %s54 = ssub.s32 512, 512
      %55 = vsyncadd [#allocation9], %s54
      %s56 = sshll.u32 [#allocation8], 4
      %s57 = int_to_ptr.vmem [resolvable:$true] %s56
      %62 = dma.hbm_to_vmem [thread:$0]  %s4, 512, %s57, [#allocation9], 128, 128, 8
    $region21: #{tpu_custom_call.1} parent=1 // pred_fallthru
      _
    // Predicated region
    $region22: #{tpu_custom_call.1} parent=1 // pred_check
      _
    $region23: #{tpu_custom_call.1} parent=1 // pred_check_branch
      %64 = sbr.rel (0) target = $region25
    $region24: #{tpu_custom_call.1} parent=1 // pred_region
      _
    $region25: #{tpu_custom_call.1} parent=1 // pred_fallthru
      _
    // Predicated region
    $region26: #{tpu_custom_call.1} parent=1 // pred_check
      _
    $region27: #{tpu_custom_call.1} parent=1 // pred_check_branch
      %66 = sbr.rel (0) target = $region29
    $region28: #{tpu_custom_call.1} parent=1 // pred_region
      %67 = dma.done [#allocation3], 128
    $region29: #{tpu_custom_call.1} parent=1 // pred_fallthru
      _
    // Predicated region
    $region30: #{tpu_custom_call.1} parent=1 // pred_check
      _
    $region31: #{tpu_custom_call.1} parent=1 // pred_check_branch
      %69 = sbr.rel (0) target = $region33
    $region32: #{tpu_custom_call.1} parent=1 // pred_region
      %70 = dma.done [#allocation6], 256
    $region33: #{tpu_custom_call.1} parent=1 // pred_fallthru
      _
    // Predicated region
    $region34: #{tpu_custom_call.1} parent=1 // pred_check
      _
    $region35: #{tpu_custom_call.1} parent=1 // pred_check_branch
      %72 = sbr.rel (0) target = $region37
    $region36: #{tpu_custom_call.1} parent=1 // pred_region
      %73 = dma.done [#allocation6], 1024
    $region37: #{tpu_custom_call.1} parent=1 // pred_fallthru
      _
    // Predicated region
    $region38: #{tpu_custom_call.1} parent=1 // pred_check
      _
    $region39: #{tpu_custom_call.1} parent=1 // pred_check_branch
      %75 = sbr.rel (0) target = $region41
    $region40: #{tpu_custom_call.1} parent=1 // pred_region
      %76 = dma.done [#allocation9], 512
    $region41: #{tpu_custom_call.1} parent=1 // pred_fallthru
      _
    %v77 = vld [vmem:[#allocation2] sm:$0xff]
    %v78 = vld [vmem:[#allocation5] sm:$0xff]
    %v79 = vld [vmem:[#allocation5 + $0x8] sm:$0xff]
    %v80 = vld [vmem:[%s3] sm:$0x1]
    %v82 = vlaneseq
    %v83 = vshrl.u32 %v82, 7
    %v84 = vsub.s32 0, %v83
    %v85 = vrot.slane %v80, %v84
    %vm87 = vcmask 130048
    %v89 = vsel %vm87, %v77, 0
    %91 = vmatprep.subr.mxu0 0.0
    %92 = vmatpush1.msra.mxu0 %v78
    %93 = vmatprep.subr.mxu0 0.0
    %94 = vmatpush1.msra.mxu0 %v79
    %95 = vmatprep.subr.mxu0 0.0
    %96 = vmatpush1.msra.mxu0 0.0
    %97 = vmatprep.subr.mxu0 0.0
    %98 = vmatpush1.msra.mxu0 0.0
    %99 = vmatprep.subr.mxu0 0.0
    %100 = vmatpush1.msra.mxu0 0.0
    %101 = vmatprep.subr.mxu0 0.0
    %102 = vmatpush1.msra.mxu0 0.0
    %103 = vmatprep.subr.mxu0 0.0
    %104 = vmatpush1.msra.mxu0 0.0
    %105 = vmatprep.subr.mxu0 0.0
    %106 = vmatpush1.msra.mxu0 0.0
    %107 = vmatprep.subr.mxu0 0.0
    %108 = vmatpush1.msra.mxu0 0.0
    %109 = vmatprep.subr.mxu0 0.0
    %110 = vmatpush1.msra.mxu0 0.0
    %111 = vmatprep.subr.mxu0 0.0
    %112 = vmatpush1.msra.mxu0 0.0
    %113 = vmatprep.subr.mxu0 0.0
    %114 = vmatpush1.msra.mxu0 0.0
    %115 = vmatprep.subr.mxu0 0.0
    %116 = vmatpush1.msra.mxu0 0.0
    %117 = vmatprep.subr.mxu0 0.0
    %118 = vmatpush1.msra.mxu0 0.0
    %119 = vmatprep.subr.mxu0 0.0
    %120 = vmatpush1.msra.mxu0 0.0
    %121 = vmatprep.subr.mxu0 0.0
    %122 = vmatpush1.msra.mxu0 0.0
    %123 = vmatprep.subr.mxu0 0.0
    %124 = vmatpush1.msra.mxu0 0.0
    %125 = vmatprep.subr.mxu0 0.0
    %126 = vmatpush1.msra.mxu0 0.0
    %127 = vmatprep.subr.mxu0 0.0
    %128 = vmatpush1.msra.mxu0 0.0
    %129 = vmatprep.subr.mxu0 0.0
    %130 = vmatpush1.msra.mxu0 0.0
    %131 = vmatprep.subr.mxu0 0.0
    %132 = vmatpush1.msra.mxu0 0.0
    %133 = vmatprep.subr.mxu0 0.0
    %134 = vmatpush1.msra.mxu0 0.0
    %135 = vmatprep.subr.mxu0 0.0
    %136 = vmatpush1.msra.mxu0 0.0
    %137 = vmatprep.subr.mxu0 0.0
    %138 = vmatpush1.msra.mxu0 0.0
    %139 = vmatprep.subr.mxu0 0.0
    %140 = vmatpush1.msra.mxu0 0.0
    %141 = vmatprep.subr.mxu0 0.0
    %142 = vmatpush1.msra.mxu0 0.0
    %143 = vmatprep.subr.mxu0 0.0
    %144 = vmatpush1.msra.mxu0 0.0
    %145 = vmatprep.subr.mxu0 0.0
    %146 = vmatpush1.msra.mxu0 0.0
    %147 = vmatprep.subr.mxu0 0.0
    %148 = vmatpush1.msra.mxu0 0.0
    %149 = vmatprep.subr.mxu0 0.0
    %150 = vmatpush1.msra.mxu0 0.0
    %151 = vmatprep.subr.mxu0 0.0
    %152 = vmatpush1.msra.mxu0 0.0
    %153 = vmatprep.subr.mxu0 0.0
    %154 = vmatpush1.msra.mxu0 0.0
    %155 = vmatprep.mubr.f32.mxu0 0.0
    %156 = vmatmul.mubr.f32.gmra.mrb[0].mxu0 %v89
    %v157 = vpop.f32.mrb[0].mxu0
    %v158 = vadd.f32 %v85, %v157
    %v159 = vpop.f32.mrb[0].mxu0
    %160 = vdwg.mxu0
    %v161 = vmax.f32 %v158, 0.0
    %v162 = vld [vmem:[#allocation7] sm:$0xff]
    %v163 = vld [vmem:[#allocation7 + $0x8] sm:$0xff]
    %v164 = vld [vmem:[#allocation7 + $0x10] sm:$0xff]
    %v165 = vld [vmem:[#allocation7 + $0x18] sm:$0xff]
    %s166 = scalar_lea.vmem %s3, 1
    %v167 = vld [vmem:[%s166] sm:$0x1]
    %v169 = vlaneseq
    %v170 = vshrl.u32 %v169, 7
    %v171 = vsub.s32 0, %v170
    %v172 = vrot.slane %v167, %v171
    %vm174 = vcmask 261120
    %v176 = vsel %vm174, %v161, 0
    %178 = vmatprep.subr.mxu0 0.0
    %179 = vmatpush1.msra.mxu0 %v162
    %180 = vmatprep.subr.mxu0 0.0
    %181 = vmatpush1.msra.mxu0 %v163
    %182 = vmatprep.subr.mxu0 0.0
    %183 = vmatpush1.msra.mxu0 %v164
    %184 = vmatprep.subr.mxu0 0.0
    %185 = vmatpush1.msra.mxu0 %v165
    %186 = vmatprep.subr.mxu0 0.0
    %187 = vmatpush1.msra.mxu0 0.0
    %188 = vmatprep.subr.mxu0 0.0
    %189 = vmatpush1.msra.mxu0 0.0
    %190 = vmatprep.subr.mxu0 0.0
    %191 = vmatpush1.msra.mxu0 0.0
    %192 = vmatprep.subr.mxu0 0.0
    %193 = vmatpush1.msra.mxu0 0.0
    %194 = vmatprep.subr.mxu0 0.0
    %195 = vmatpush1.msra.mxu0 0.0
    %196 = vmatprep.subr.mxu0 0.0
    %197 = vmatpush1.msra.mxu0 0.0
    %198 = vmatprep.subr.mxu0 0.0
    %199 = vmatpush1.msra.mxu0 0.0
    %200 = vmatprep.subr.mxu0 0.0
    %201 = vmatpush1.msra.mxu0 0.0
    %202 = vmatprep.subr.mxu0 0.0
    %203 = vmatpush1.msra.mxu0 0.0
    %204 = vmatprep.subr.mxu0 0.0
    %205 = vmatpush1.msra.mxu0 0.0
    %206 = vmatprep.subr.mxu0 0.0
    %207 = vmatpush1.msra.mxu0 0.0
    %208 = vmatprep.subr.mxu0 0.0
    %209 = vmatpush1.msra.mxu0 0.0
    %210 = vmatprep.subr.mxu0 0.0
    %211 = vmatpush1.msra.mxu0 0.0
    %212 = vmatprep.subr.mxu0 0.0
    %213 = vmatpush1.msra.mxu0 0.0
    %214 = vmatprep.subr.mxu0 0.0
    %215 = vmatpush1.msra.mxu0 0.0
    %216 = vmatprep.subr.mxu0 0.0
    %217 = vmatpush1.msra.mxu0 0.0
    %218 = vmatprep.subr.mxu0 0.0
    %219 = vmatpush1.msra.mxu0 0.0
    %220 = vmatprep.subr.mxu0 0.0
    %221 = vmatpush1.msra.mxu0 0.0
    %222 = vmatprep.subr.mxu0 0.0
    %223 = vmatpush1.msra.mxu0 0.0
    %224 = vmatprep.subr.mxu0 0.0
    %225 = vmatpush1.msra.mxu0 0.0
    %226 = vmatprep.subr.mxu0 0.0
    %227 = vmatpush1.msra.mxu0 0.0
    %228 = vmatprep.subr.mxu0 0.0
    %229 = vmatpush1.msra.mxu0 0.0
    %230 = vmatprep.subr.mxu0 0.0
    %231 = vmatpush1.msra.mxu0 0.0
    %232 = vmatprep.subr.mxu0 0.0
    %233 = vmatpush1.msra.mxu0 0.0
    %234 = vmatprep.subr.mxu0 0.0
    %235 = vmatpush1.msra.mxu0 0.0
    %236 = vmatprep.subr.mxu0 0.0
    %237 = vmatpush1.msra.mxu0 0.0
    %238 = vmatprep.subr.mxu0 0.0
    %239 = vmatpush1.msra.mxu0 0.0
    %240 = vmatprep.subr.mxu0 0.0
    %241 = vmatpush1.msra.mxu0 0.0
    %242 = vmatprep.mubr.f32.mxu0 0.0
    %243 = vmatmul.mubr.f32.gmra.mrb[0].mxu0 %v176
    %v244 = vpop.f32.mrb[0].mxu0
    %v245 = vadd.f32 %v172, %v244
    %v246 = vpop.f32.mrb[0].mxu0
    %247 = vdwg.mxu0
    %v248 = vmax.f32 %v245, 0.0
    %s249 = scalar_lea.vmem [#allocation7], 32
    %v250 = vld [vmem:[%s249] sm:$0xff]
    %v251 = vld [vmem:[%s249 + $0x8] sm:$0xff]
    %v252 = vld [vmem:[%s249 + $0x10] sm:$0xff]
    %v253 = vld [vmem:[%s249 + $0x18] sm:$0xff]
    %s254 = scalar_lea.vmem %s3, 2
    %v255 = vld [vmem:[%s254] sm:$0x1]
    %v257 = vlaneseq
    %v258 = vshrl.u32 %v257, 7
    %v259 = vsub.s32 0, %v258
    %v260 = vrot.slane %v255, %v259
    %v263 = vsel %vm174, %v248, 0
    %265 = vmatprep.subr.mxu0 0.0
    %266 = vmatpush1.msra.mxu0 %v250
    %267 = vmatprep.subr.mxu0 0.0
    %268 = vmatpush1.msra.mxu0 %v251
    %269 = vmatprep.subr.mxu0 0.0
    %270 = vmatpush1.msra.mxu0 %v252
    %271 = vmatprep.subr.mxu0 0.0
    %272 = vmatpush1.msra.mxu0 %v253
    %273 = vmatprep.subr.mxu0 0.0
    %274 = vmatpush1.msra.mxu0 0.0
    %275 = vmatprep.subr.mxu0 0.0
    %276 = vmatpush1.msra.mxu0 0.0
    %277 = vmatprep.subr.mxu0 0.0
    %278 = vmatpush1.msra.mxu0 0.0
    %279 = vmatprep.subr.mxu0 0.0
    %280 = vmatpush1.msra.mxu0 0.0
    %281 = vmatprep.subr.mxu0 0.0
    %282 = vmatpush1.msra.mxu0 0.0
    %283 = vmatprep.subr.mxu0 0.0
    %284 = vmatpush1.msra.mxu0 0.0
    %285 = vmatprep.subr.mxu0 0.0
    %286 = vmatpush1.msra.mxu0 0.0
    %287 = vmatprep.subr.mxu0 0.0
    %288 = vmatpush1.msra.mxu0 0.0
    %289 = vmatprep.subr.mxu0 0.0
    %290 = vmatpush1.msra.mxu0 0.0
    %291 = vmatprep.subr.mxu0 0.0
    %292 = vmatpush1.msra.mxu0 0.0
    %293 = vmatprep.subr.mxu0 0.0
    %294 = vmatpush1.msra.mxu0 0.0
    %295 = vmatprep.subr.mxu0 0.0
    %296 = vmatpush1.msra.mxu0 0.0
    %297 = vmatprep.subr.mxu0 0.0
    %298 = vmatpush1.msra.mxu0 0.0
    %299 = vmatprep.subr.mxu0 0.0
    %300 = vmatpush1.msra.mxu0 0.0
    %301 = vmatprep.subr.mxu0 0.0
    %302 = vmatpush1.msra.mxu0 0.0
    %303 = vmatprep.subr.mxu0 0.0
    %304 = vmatpush1.msra.mxu0 0.0
    %305 = vmatprep.subr.mxu0 0.0
    %306 = vmatpush1.msra.mxu0 0.0
    %307 = vmatprep.subr.mxu0 0.0
    %308 = vmatpush1.msra.mxu0 0.0
    %309 = vmatprep.subr.mxu0 0.0
    %310 = vmatpush1.msra.mxu0 0.0
    %311 = vmatprep.subr.mxu0 0.0
    %312 = vmatpush1.msra.mxu0 0.0
    %313 = vmatprep.subr.mxu0 0.0
    %314 = vmatpush1.msra.mxu0 0.0
    %315 = vmatprep.subr.mxu0 0.0
    %316 = vmatpush1.msra.mxu0 0.0
    %317 = vmatprep.subr.mxu0 0.0
    %318 = vmatpush1.msra.mxu0 0.0
    %319 = vmatprep.subr.mxu0 0.0
    %320 = vmatpush1.msra.mxu0 0.0
    %321 = vmatprep.subr.mxu0 0.0
    %322 = vmatpush1.msra.mxu0 0.0
    %323 = vmatprep.subr.mxu0 0.0
    %324 = vmatpush1.msra.mxu0 0.0
    %325 = vmatprep.subr.mxu0 0.0
    %326 = vmatpush1.msra.mxu0 0.0
    %327 = vmatprep.subr.mxu0 0.0
    %328 = vmatpush1.msra.mxu0 0.0
    %329 = vmatprep.mubr.f32.mxu0 0.0
    %330 = vmatmul.mubr.f32.gmra.mrb[0].mxu0 %v263
    %v331 = vpop.f32.mrb[0].mxu0
    %v332 = vadd.f32 %v260, %v331
    %v333 = vpop.f32.mrb[0].mxu0
    %334 = vdwg.mxu0
    %v335 = vmax.f32 %v332, 0.0
    %v336 = vld [vmem:[#allocation8] sm:$0xff]
    %v337 = vld [vmem:[#allocation8 + $0x8] sm:$0xff]
    %v338 = vld [vmem:[#allocation8 + $0x10] sm:$0xff]
    %v339 = vld [vmem:[#allocation8 + $0x18] sm:$0xff]
    %v340 = vld [vmem:[%s5] sm:$0x1]
    %v342 = vlaneseq
    %v343 = vshrl.u32 %v342, 7
    %v344 = vsub.s32 0, %v343
    %v345 = vrot.slane %v340, %v344
    %v348 = vsel %vm174, %v335, 0
    %350 = vmatprep.subr.mxu0 0.0
    %351 = vmatpush1.msra.mxu0 %v336
    %352 = vmatprep.subr.mxu0 0.0
    %353 = vmatpush1.msra.mxu0 %v337
    %354 = vmatprep.subr.mxu0 0.0
    %355 = vmatpush1.msra.mxu0 %v338
    %356 = vmatprep.subr.mxu0 0.0
    %357 = vmatpush1.msra.mxu0 %v339
    %358 = vmatprep.subr.mxu0 0.0
    %359 = vmatpush1.msra.mxu0 0.0
    %360 = vmatprep.subr.mxu0 0.0
    %361 = vmatpush1.msra.mxu0 0.0
    %362 = vmatprep.subr.mxu0 0.0
    %363 = vmatpush1.msra.mxu0 0.0
    %364 = vmatprep.subr.mxu0 0.0
    %365 = vmatpush1.msra.mxu0 0.0
    %366 = vmatprep.subr.mxu0 0.0
    %367 = vmatpush1.msra.mxu0 0.0
    %368 = vmatprep.subr.mxu0 0.0
    %369 = vmatpush1.msra.mxu0 0.0
    %370 = vmatprep.subr.mxu0 0.0
    %371 = vmatpush1.msra.mxu0 0.0
    %372 = vmatprep.subr.mxu0 0.0
    %373 = vmatpush1.msra.mxu0 0.0
    %374 = vmatprep.subr.mxu0 0.0
    %375 = vmatpush1.msra.mxu0 0.0
    %376 = vmatprep.subr.mxu0 0.0
    %377 = vmatpush1.msra.mxu0 0.0
    %378 = vmatprep.subr.mxu0 0.0
    %379 = vmatpush1.msra.mxu0 0.0
    %380 = vmatprep.subr.mxu0 0.0
    %381 = vmatpush1.msra.mxu0 0.0
    %382 = vmatprep.subr.mxu0 0.0
    %383 = vmatpush1.msra.mxu0 0.0
    %384 = vmatprep.subr.mxu0 0.0
    %385 = vmatpush1.msra.mxu0 0.0
    %386 = vmatprep.subr.mxu0 0.0
    %387 = vmatpush1.msra.mxu0 0.0
    %388 = vmatprep.subr.mxu0 0.0
    %389 = vmatpush1.msra.mxu0 0.0
    %390 = vmatprep.subr.mxu0 0.0
    %391 = vmatpush1.msra.mxu0 0.0
    %392 = vmatprep.subr.mxu0 0.0
    %393 = vmatpush1.msra.mxu0 0.0
    %394 = vmatprep.subr.mxu0 0.0
    %395 = vmatpush1.msra.mxu0 0.0
    %396 = vmatprep.subr.mxu0 0.0
    %397 = vmatpush1.msra.mxu0 0.0
    %398 = vmatprep.subr.mxu0 0.0
    %399 = vmatpush1.msra.mxu0 0.0
    %400 = vmatprep.subr.mxu0 0.0
    %401 = vmatpush1.msra.mxu0 0.0
    %402 = vmatprep.subr.mxu0 0.0
    %403 = vmatpush1.msra.mxu0 0.0
    %404 = vmatprep.subr.mxu0 0.0
    %405 = vmatpush1.msra.mxu0 0.0
    %406 = vmatprep.subr.mxu0 0.0
    %407 = vmatpush1.msra.mxu0 0.0
    %408 = vmatprep.subr.mxu0 0.0
    %409 = vmatpush1.msra.mxu0 0.0
    %410 = vmatprep.subr.mxu0 0.0
    %411 = vmatpush1.msra.mxu0 0.0
    %412 = vmatprep.subr.mxu0 0.0
    %413 = vmatpush1.msra.mxu0 0.0
    %414 = vmatprep.mubr.f32.mxu0 0.0
    %415 = vmatmul.mubr.f32.gmra.mrb[0].mxu0 %v348
    %v416 = vpop.f32.mrb[0].mxu0
    %v417 = vadd.f32 %v345, %v416
    %v418 = vpop.f32.mrb[0].mxu0
    %419 = vdwg.mxu0
    %420 = vst [vmem:[#allocation10] sm:$0xff] %v417
    // Predicated region
    $region42: #{tpu_custom_call.1} parent=1 // pred_check
      _
    $region43: #{tpu_custom_call.1} parent=1 // pred_check_branch
      %422 = sbr.rel (0) target = $region45
    $region44: #{tpu_custom_call.1} parent=1 // pred_region
      %s424 = ssub.s32 128, 128
      %425 = vsyncadd [#allocation4], %s424
      %s427 = sshll.u32 [#allocation10], 4
      %s428 = int_to_ptr.vmem [resolvable:$true] %s427
      %430 = dma.vmem_to_hbm [thread:$0]  %s428, 128, %s6, [#allocation4]
    $region45: #{tpu_custom_call.1} parent=1 // pred_fallthru
      _
    // Predicated region
    $region46: #{tpu_custom_call.1} parent=1 // pred_check
      _
    $region47: #{tpu_custom_call.1} parent=1 // pred_check_branch
      %432 = sbr.rel (0) target = $region49
    $region48: #{tpu_custom_call.1} parent=1 // pred_region
      %433 = dma.done [#allocation4], 128
    $region49: #{tpu_custom_call.1} parent=1 // pred_fallthru
      _
    %434 = vsyncpa [#allocation3], 1
    %435 = vsyncpa [#allocation6], 1
    %436 = vsyncpa [#allocation9], 1
    %437 = vsyncpa [#allocation4], 1

</llo_original>
